<compile_context>
chip_gen: v7x
topology: tpu7x:2x2x1
jax: 0.10.0
libtpu: 0.0.40
codegen_flags: <defaults>
</compile_context>

<pallas_src>
import jax
import jax.numpy as jnp
from jax.experimental import pallas as pl
from jax.experimental.pallas import tpu as pltpu


# ---------------------------------------------------------------------------
# Fused Pallas kernel: T decode steps, weights resident, hidden carried in VMEM
# ---------------------------------------------------------------------------
def _make_fused_decoder_kernel(B, E, H):
    """Build the kernel as a closure over static shapes."""

    def kernel(tok_ref,          # SMEM (T, B) int32   scalar-prefetched token ids
               emb_ref,          # VMEM (V, E)  f32    resident embedding table
               h0_ref,           # VMEM (B, H)  f32    initial hidden
               w_in_ref,         # VMEM (E+H,H) bf16   resident [W_ih^T ; W_hh^T]
               b_rnn_ref,        # VMEM (1, H)  f32    b_ih + b_hh
               w_out_ref,        # VMEM (H, V)  bf16   resident W_out^T
               b_out_ref,        # VMEM (1, V)  f32
               logp_ref,         # VMEM (B, V)  f32    per-step output block
               hout_ref,         # VMEM (B, H)  f32    final-hidden output (resident)
               xh_scratch,       # VMEM (B, E+H) f32   concatenated [x ; h] tile
               h_scratch):       # VMEM (B, H)   f32   hidden-state carry
        t = pl.program_id(0)

        @pl.when(t == 0)
        def _init():
            h_scratch[...] = h0_ref[...]

        # ---- Embedding lookup fused in-kernel (Dropout = identity, eval mode) --
        # TODO(synk): training-mode dropout would mask with pltpu.prng_random_bits.
        for i in range(B):
            tok = tok_ref[t, i]
            xh_scratch[pl.ds(i, 1), pl.ds(0, E)] = emb_ref[pl.ds(tok, 1), :]

        # hidden half of the concatenated activation tile
        xh_scratch[:, pl.ds(E, H)] = h_scratch[...]

        # ---- RNN cell: ONE K=(E+H) MXU matmul, bf16 inputs, f32 accumulate ----
        xh = xh_scratch[...].astype(jnp.bfloat16)
        pre = jnp.dot(xh, w_in_ref[...], preferred_element_type=jnp.float32)
        h_new = jnp.tanh(pre + b_rnn_ref[...])                       # (B, H) f32

        # ---- Output projection + numerically stable log-softmax (f32 math) ----
        logits = jnp.dot(h_new.astype(jnp.bfloat16), w_out_ref[...],
                         preferred_element_type=jnp.float32) + b_out_ref[...]
        m = jnp.max(logits, axis=-1, keepdims=True)
        shifted = logits - m
        lse = jnp.log(jnp.sum(jnp.exp(shifted), axis=-1, keepdims=True))

        logp_ref[...] = (shifted - lse).astype(logp_ref.dtype)
        h_scratch[...] = h_new
        hout_ref[...] = h_new.astype(hout_ref.dtype)

    return kernel


def _decoder_pallas(tokens_tb, h0, params):
    """tokens_tb: (T, B) int32 token ids; h0: (B, H) f32.
    Returns (log_probs (T, B, V) f32, final hidden (B, H) f32)."""
    T, B = tokens_tb.shape
    V, E = params["emb"].shape
    H = h0.shape[-1]

    kernel = _make_fused_decoder_kernel(B, E, H)
    grid_spec = pltpu.PrefetchScalarGridSpec(
        num_scalar_prefetch=1,
        grid=(T,),
        in_specs=[
            pl.BlockSpec((V, E), lambda t, tok: (0, 0)),       # emb (VMEM resident)
            pl.BlockSpec((B, H), lambda t, tok: (0, 0)),       # h0
            pl.BlockSpec((E + H, H), lambda t, tok: (0, 0)),   # fused [W_ih^T;W_hh^T]
            pl.BlockSpec((1, H), lambda t, tok: (0, 0)),       # b_ih + b_hh
            pl.BlockSpec((H, V), lambda t, tok: (0, 0)),       # W_out^T
            pl.BlockSpec((1, V), lambda t, tok: (0, 0)),       # b_out
        ],
        out_specs=(
            pl.BlockSpec((None, B, V), lambda t, tok: (t, 0, 0)),   # per-step logp
            pl.BlockSpec((B, H), lambda t, tok: (0, 0)),            # final hidden
        ),
        scratch_shapes=[
            pltpu.VMEM((B, E + H), jnp.float32),   # concatenated [x ; h] tile
            pltpu.VMEM((B, H), jnp.float32),       # hidden-state carry
        ],
    )
    return pl.pallas_call(
        kernel,
        grid_spec=grid_spec,
        out_shape=(
            jax.ShapeDtypeStruct((T, B, V), jnp.float32),
            jax.ShapeDtypeStruct((B, H), jnp.float32),
        ),
        compiler_params=pltpu.CompilerParams(
            dimension_semantics=("arbitrary",),     # hidden carried across steps
            vmem_limit_bytes=32 * 1024 * 1024,      # raise for realistic vocab sizes
        ),
    )(tokens_tb, params["emb"], h0,
      params["w_in_t"], params["b_rnn"], params["w_out_t"], params["b_out"])


# ---------------------------------------------------------------------------
# Module wrappers
# ---------------------------------------------------------------------------
def init_decoder_params(key, emb_size, decoder_hidden_size, output_size):
    """Deterministic parameter init mimicking PyTorch defaults.
    RNN/Linear weights stored pre-transposed ([in, out]); matmul weights bf16."""
    k = jax.random.split(key, 7)
    H, E, V = decoder_hidden_size, emb_size, output_size
    bound = 1.0 / jnp.sqrt(jnp.float32(H))
    u = lambda kk, shape: jax.random.uniform(kk, shape, jnp.float32, -bound, bound)
    w_ih_t = u(k[1], (E, H))
    w_hh_t = u(k[2], (H, H))
    return {
        "emb": jax.random.normal(k[0], (V, E), jnp.float32),        # nn.Embedding N(0,1)
        "w_in_t": jnp.concatenate([w_ih_t, w_hh_t], axis=0).astype(jnp.bfloat16),
        "b_rnn": u(k[3], (1, H)) + u(k[4], (1, H)),                 # b_ih + b_hh (f32)
        "w_out_t": u(k[5], (H, V)).astype(jnp.bfloat16),
        "b_out": u(k[6], (1, V)),
    }


@jax.jit
def decoder_forward(tokens, hidden, params):
    """Matches Decoder.forward (single step).
    tokens: int (B, 1); hidden: f32 (1, B, H) -> (log_probs (B, V), hidden (1, B, H))."""
    tokens = tokens.reshape(-1, 1).astype(jnp.int32)
    logp, h_new = _decoder_pallas(tokens.reshape(1, -1), hidden[0], params)
    return logp[0], h_new[None]


@jax.jit
def decoder_decode(tokens_seq, hidden, params):
    """T teacher-forced decode steps fused into ONE pallas_call.
    tokens_seq: int (T, B); hidden: f32 (1, B, H) -> (log_probs (T, B, V), hidden)."""
    logp, h_final = _decoder_pallas(tokens_seq.astype(jnp.int32), hidden[0], params)
    return logp, h_final[None]


# ---------------------------------------------------------------------------
# Pure-JAX precision-matched references
# ---------------------------------------------------------------------------
def _ref_step(token_ids, h, params):
    """One decode step in plain JAX (bf16-rounded matmul inputs, f32 accumulate)."""
    x = jnp.take(params["emb"], token_ids, axis=0)                   # (B, E) f32
    xh = jnp.concatenate([x, h], axis=-1).astype(jnp.bfloat16).astype(jnp.float32)
    w_in = params["w_in_t"].astype(jnp.float32)
    pre = jnp.dot(xh, w_in, precision=jax.lax.Precision.HIGHEST) + params["b_rnn"]
    h_new = jnp.tanh(pre)
    w_out = params["w_out_t"].astype(jnp.float32)
    logits = jnp.dot(h_new.astype(jnp.bfloat16).astype(jnp.float32), w_out,
                     precision=jax.lax.Precision.HIGHEST) + params["b_out"]
    return jax.nn.log_softmax(logits, axis=-1), h_new


def decoder_forward_ref(tokens, hidden, params):
    logp, h_new = _ref_step(tokens.reshape(-1), hidden[0], params)
    return logp, h_new[None]


def decoder_decode_ref(tokens_seq, hidden, params):
    h = hidden[0]
    outs = []
    for t in range(tokens_seq.shape[0]):
        logp, h = _ref_step(tokens_seq[t], h, params)
        outs.append(logp)
    return jnp.stack(outs, axis=0), h[None]


# ---------------------------------------------------------------------------
if __name__ == "__main__":
    B = 8          # batch_size
    EMB = 128      # emb_size
    HID = 128      # decoder_hidden_size
    VOCAB = 256    # output_size (lane-dense, multiple of 128)
    T = 8          # decode steps for the fused multi-step path

    key = jax.random.PRNGKey(0)
    k_params, k_tok, k_hid, k_seq = jax.random.split(key, 4)

    params = init_decoder_params(k_params, EMB, HID, VOCAB)
    tokens = jax.random.randint(k_tok, (B, 1), 0, VOCAB, dtype=jnp.int32)
    hidden = jax.random.normal(k_hid, (1, B, HID), jnp.float32)

    # ---- single-step forward (exactly the module's forward()) ----
    logp, h_out = decoder_forward(tokens, hidden, params)
    jax.block_until_ready((logp, h_out))
    logp_ref, h_ref = decoder_forward_ref(tokens, hidden, params)
    assert logp.shape == (B, VOCAB) and h_out.shape == (1, B, HID)
    assert jnp.allclose(logp, logp_ref, atol=5e-3, rtol=5e-3)
    assert jnp.allclose(h_out, h_ref, atol=5e-3, rtol=5e-3)

    # ---- fused multi-step decode (T module-forward calls, one kernel) ----
    tokens_seq = jax.random.randint(k_seq, (T, B), 0, VOCAB, dtype=jnp.int32)
    logp_seq, h_final = decoder_decode(tokens_seq, hidden, params)
    jax.block_until_ready((logp_seq, h_final))
    logp_seq_ref, h_final_ref = decoder_decode_ref(tokens_seq, hidden, params)
    assert logp_seq.shape == (T, B, VOCAB) and h_final.shape == (1, B, HID)
    assert jnp.allclose(logp_seq, logp_seq_ref, atol=5e-3, rtol=5e-3)
    assert jnp.allclose(h_final, h_final_ref, atol=5e-3, rtol=5e-3)

    print("KERNEL_OK")
</pallas_src>

<mosaic_0001>
module attributes {stable_mosaic.version = 11 : i64} {
  func.func @kernel(%arg0: i32, %arg1: memref<1x8xi32, #tpu.memory_space<smem>>, %arg2: memref<256x128xf32, #tpu.memory_space<vmem>>, %arg3: memref<8x128xf32, #tpu.memory_space<vmem>>, %arg4: memref<256x128xbf16, #tpu.memory_space<vmem>>, %arg5: memref<1x128xf32, #tpu.memory_space<vmem>>, %arg6: memref<128x256xbf16, #tpu.memory_space<vmem>>, %arg7: memref<1x256xf32, #tpu.memory_space<vmem>>, %arg8: memref<1x8x256xf32, #tpu.memory_space<vmem>>, %arg9: memref<8x128xf32, #tpu.memory_space<vmem>>, %arg10: memref<8x256xf32, #tpu.memory_space<vmem>>, %arg11: memref<8x128xf32, #tpu.memory_space<vmem>>) attributes {dimension_semantics = [#tpu.dimension_semantics<arbitrary>], iteration_bounds = array<i64: 1>, scalar_prefetch = 1 : i64, scratch_operands = 2 : i64, tpu.core_type = #tpu.core_type<tc>, window_params = [{pipeline_mode = #tpu.pipeline_mode<synchronous>, transform_indices = @transform_0, window_bounds = array<i64: 256, 128>}, {pipeline_mode = #tpu.pipeline_mode<synchronous>, transform_indices = @transform_1, window_bounds = array<i64: 8, 128>}, {pipeline_mode = #tpu.pipeline_mode<synchronous>, transform_indices = @transform_2, window_bounds = array<i64: 256, 128>}, {pipeline_mode = #tpu.pipeline_mode<synchronous>, transform_indices = @transform_3, window_bounds = array<i64: 1, 128>}, {pipeline_mode = #tpu.pipeline_mode<synchronous>, transform_indices = @transform_4, window_bounds = array<i64: 128, 256>}, {pipeline_mode = #tpu.pipeline_mode<synchronous>, transform_indices = @transform_5, window_bounds = array<i64: 1, 256>}, {transform_indices = @transform_6, window_bounds = array<i64: 1, 8, 256>}, {pipeline_mode = #tpu.pipeline_mode<synchronous>, transform_indices = @transform_7, window_bounds = array<i64: 8, 128>}]} {
    %c0_i32 = arith.constant 0 : i32
    %0 = arith.cmpi eq, %arg0, %c0_i32 : i32
    %1 = arith.extui %0 : i1 to i32
    %c0_i32_0 = arith.constant 0 : i32
    %2 = arith.cmpi ne, %1, %c0_i32_0 : i32
    scf.if %2 {
      %c0_48 = arith.constant 0 : index
      %c0_49 = arith.constant 0 : index
      %74 = vector.load %arg3[%c0_48, %c0_49] : memref<8x128xf32, #tpu.memory_space<vmem>>, vector<8x128xf32>
      %c0_50 = arith.constant 0 : index
      %c0_51 = arith.constant 0 : index
      %75 = vector.load %arg11[%c0_50, %c0_51] : memref<8x128xf32, #tpu.memory_space<vmem>>, vector<8x128xf32>
      tpu.vector_store %arg11[%c0_50, %c0_51], %74 {strides = array<i32>} : memref<8x128xf32, #tpu.memory_space<vmem>>, vector<8x128xf32>,
    } else {
    }
    %3 = arith.index_cast %arg0 : i32 to index
    %c0 = arith.constant 0 : index
    %4 = memref.load %arg1[%3, %c0] : memref<1x8xi32, #tpu.memory_space<smem>>
    %5 = arith.index_cast %4 : i32 to index
    %c0_1 = arith.constant 0 : index
    %6 = vector.load %arg2[%5, %c0_1] : memref<256x128xf32, #tpu.memory_space<vmem>>, vector<1x128xf32>
    %c0_2 = arith.constant 0 : index
    %c0_3 = arith.constant 0 : index
    %7 = vector.load %arg10[%c0_2, %c0_3] : memref<8x256xf32, #tpu.memory_space<vmem>>, vector<1x128xf32>
    tpu.vector_store %arg10[%c0_2, %c0_3], %6 {strides = array<i32>} : memref<8x256xf32, #tpu.memory_space<vmem>>, vector<1x128xf32>,
    %8 = arith.index_cast %arg0 : i32 to index
    %c1 = arith.constant 1 : index
    %9 = memref.load %arg1[%8, %c1] : memref<1x8xi32, #tpu.memory_space<smem>>
    %10 = arith.index_cast %9 : i32 to index
    %c0_4 = arith.constant 0 : index
    %11 = vector.load %arg2[%10, %c0_4] : memref<256x128xf32, #tpu.memory_space<vmem>>, vector<1x128xf32>
    %c1_5 = arith.constant 1 : index
    %c0_6 = arith.constant 0 : index
    %12 = vector.load %arg10[%c1_5, %c0_6] : memref<8x256xf32, #tpu.memory_space<vmem>>, vector<1x128xf32>
    tpu.vector_store %arg10[%c1_5, %c0_6], %11 {strides = array<i32>} : memref<8x256xf32, #tpu.memory_space<vmem>>, vector<1x128xf32>,
    %13 = arith.index_cast %arg0 : i32 to index
    %c2 = arith.constant 2 : index
    %14 = memref.load %arg1[%13, %c2] : memref<1x8xi32, #tpu.memory_space<smem>>
    %15 = arith.index_cast %14 : i32 to index
    %c0_7 = arith.constant 0 : index
    %16 = vector.load %arg2[%15, %c0_7] : memref<256x128xf32, #tpu.memory_space<vmem>>, vector<1x128xf32>
    %c2_8 = arith.constant 2 : index
    %c0_9 = arith.constant 0 : index
    %17 = vector.load %arg10[%c2_8, %c0_9] : memref<8x256xf32, #tpu.memory_space<vmem>>, vector<1x128xf32>
    tpu.vector_store %arg10[%c2_8, %c0_9], %16 {strides = array<i32>} : memref<8x256xf32, #tpu.memory_space<vmem>>, vector<1x128xf32>,
    %18 = arith.index_cast %arg0 : i32 to index
    %c3 = arith.constant 3 : index
    %19 = memref.load %arg1[%18, %c3] : memref<1x8xi32, #tpu.memory_space<smem>>
    %20 = arith.index_cast %19 : i32 to index
    %c0_10 = arith.constant 0 : index
    %21 = vector.load %arg2[%20, %c0_10] : memref<256x128xf32, #tpu.memory_space<vmem>>, vector<1x128xf32>
    %c3_11 = arith.constant 3 : index
    %c0_12 = arith.constant 0 : index
    %22 = vector.load %arg10[%c3_11, %c0_12] : memref<8x256xf32, #tpu.memory_space<vmem>>, vector<1x128xf32>
    tpu.vector_store %arg10[%c3_11, %c0_12], %21 {strides = array<i32>} : memref<8x256xf32, #tpu.memory_space<vmem>>, vector<1x128xf32>,
    %23 = arith.index_cast %arg0 : i32 to index
    %c4 = arith.constant 4 : index
    %24 = memref.load %arg1[%23, %c4] : memref<1x8xi32, #tpu.memory_space<smem>>
    %25 = arith.index_cast %24 : i32 to index
    %c0_13 = arith.constant 0 : index
    %26 = vector.load %arg2[%25, %c0_13] : memref<256x128xf32, #tpu.memory_space<vmem>>, vector<1x128xf32>
    %c4_14 = arith.constant 4 : index
    %c0_15 = arith.constant 0 : index
    %27 = vector.load %arg10[%c4_14, %c0_15] : memref<8x256xf32, #tpu.memory_space<vmem>>, vector<1x128xf32>
    tpu.vector_store %arg10[%c4_14, %c0_15], %26 {strides = array<i32>} : memref<8x256xf32, #tpu.memory_space<vmem>>, vector<1x128xf32>,
    %28 = arith.index_cast %arg0 : i32 to index
    %c5 = arith.constant 5 : index
    %29 = memref.load %arg1[%28, %c5] : memref<1x8xi32, #tpu.memory_space<smem>>
    %30 = arith.index_cast %29 : i32 to index
    %c0_16 = arith.constant 0 : index
    %31 = vector.load %arg2[%30, %c0_16] : memref<256x128xf32, #tpu.memory_space<vmem>>, vector<1x128xf32>
    %c5_17 = arith.constant 5 : index
    %c0_18 = arith.constant 0 : index
    %32 = vector.load %arg10[%c5_17, %c0_18] : memref<8x256xf32, #tpu.memory_space<vmem>>, vector<1x128xf32>
    tpu.vector_store %arg10[%c5_17, %c0_18], %31 {strides = array<i32>} : memref<8x256xf32, #tpu.memory_space<vmem>>, vector<1x128xf32>,
    %33 = arith.index_cast %arg0 : i32 to index
    %c6 = arith.constant 6 : index
    %34 = memref.load %arg1[%33, %c6] : memref<1x8xi32, #tpu.memory_space<smem>>
    %35 = arith.index_cast %34 : i32 to index
    %c0_19 = arith.constant 0 : index
    %36 = vector.load %arg2[%35, %c0_19] : memref<256x128xf32, #tpu.memory_space<vmem>>, vector<1x128xf32>
    %c6_20 = arith.constant 6 : index
    %c0_21 = arith.constant 0 : index
    %37 = vector.load %arg10[%c6_20, %c0_21] : memref<8x256xf32, #tpu.memory_space<vmem>>, vector<1x128xf32>
    tpu.vector_store %arg10[%c6_20, %c0_21], %36 {strides = array<i32>} : memref<8x256xf32, #tpu.memory_space<vmem>>, vector<1x128xf32>,
    %38 = arith.index_cast %arg0 : i32 to index
    %c7 = arith.constant 7 : index
    %39 = memref.load %arg1[%38, %c7] : memref<1x8xi32, #tpu.memory_space<smem>>
    %40 = arith.index_cast %39 : i32 to index
    %c0_22 = arith.constant 0 : index
    %41 = vector.load %arg2[%40, %c0_22] : memref<256x128xf32, #tpu.memory_space<vmem>>, vector<1x128xf32>
    %c7_23 = arith.constant 7 : index
    %c0_24 = arith.constant 0 : index
    %42 = vector.load %arg10[%c7_23, %c0_24] : memref<8x256xf32, #tpu.memory_space<vmem>>, vector<1x128xf32>
    tpu.vector_store %arg10[%c7_23, %c0_24], %41 {strides = array<i32>} : memref<8x256xf32, #tpu.memory_space<vmem>>, vector<1x128xf32>,
    %c0_25 = arith.constant 0 : index
    %c0_26 = arith.constant 0 : index
    %43 = vector.load %arg11[%c0_25, %c0_26] : memref<8x128xf32, #tpu.memory_space<vmem>>, vector<8x128xf32>
    %c0_27 = arith.constant 0 : index
    %c128 = arith.constant 128 : index
    %44 = vector.load %arg10[%c0_27, %c128] : memref<8x256xf32, #tpu.memory_space<vmem>>, vector<8x128xf32>
    tpu.vector_store %arg10[%c0_27, %c128], %43 {strides = array<i32>} : memref<8x256xf32, #tpu.memory_space<vmem>>, vector<8x128xf32>,
    %c0_28 = arith.constant 0 : index
    %c0_29 = arith.constant 0 : index
    %45 = vector.load %arg10[%c0_28, %c0_29] : memref<8x256xf32, #tpu.memory_space<vmem>>, vector<8x256xf32>
    %46 = arith.truncf %45 : vector<8x256xf32> to vector<8x256xbf16>
    %c0_30 = arith.constant 0 : index
    %c0_31 = arith.constant 0 : index
    %47 = vector.load %arg4[%c0_30, %c0_31] : memref<256x128xbf16, #tpu.memory_space<vmem>>, vector<256x128xbf16>
    %cst = arith.constant dense<0.000000e+00> : vector<8x128xf32>
    %48 = tpu.matmul %46, %47, %cst {dimension_numbers = #tpu.dot_dimension_numbers<[1], [0], [0], [1], [0, 0, 1, 1], [], []>} : vector<8x256xbf16>, vector<256x128xbf16>, vector<8x128xf32> -> vector<8x128xf32>
    %c0_32 = arith.constant 0 : index
    %c0_33 = arith.constant 0 : index
    %49 = vector.load %arg5[%c0_32, %c0_33] : memref<1x128xf32, #tpu.memory_space<vmem>>, vector<1x128xf32>
    %50 = vector.broadcast %49 : vector<1x128xf32> to vector<8x128xf32>
    %51 = arith.addf %48, %50 : vector<8x128xf32>
    %52 = math.tanh %51 : vector<8x128xf32>
    %53 = arith.truncf %52 : vector<8x128xf32> to vector<8x128xbf16>
    %c0_34 = arith.constant 0 : index
    %c0_35 = arith.constant 0 : index
    %54 = vector.load %arg6[%c0_34, %c0_35] : memref<128x256xbf16, #tpu.memory_space<vmem>>, vector<128x256xbf16>
    %cst_36 = arith.constant dense<0.000000e+00> : vector<8x256xf32>
    %55 = tpu.matmul %53, %54, %cst_36 {dimension_numbers = #tpu.dot_dimension_numbers<[1], [0], [0], [1], [0, 0, 1, 1], [], []>} : vector<8x128xbf16>, vector<128x256xbf16>, vector<8x256xf32> -> vector<8x256xf32>
    %c0_37 = arith.constant 0 : index
    %c0_38 = arith.constant 0 : index
    %56 = vector.load %arg7[%c0_37, %c0_38] : memref<1x256xf32, #tpu.memory_space<vmem>>, vector<1x256xf32>
    %57 = vector.broadcast %56 : vector<1x256xf32> to vector<8x256xf32>
    %58 = arith.addf %55, %57 : vector<8x256xf32>
    %cst_39 = arith.constant dense<0xFF800000> : vector<8xf32>
    %59 = vector.multi_reduction <maximumf>, %58, %cst_39 [1] : vector<8x256xf32> to vector<8xf32>
    %60 = vector.shape_cast %59 : vector<8xf32> to vector<8x1xf32>
    %61 = vector.broadcast %60 : vector<8x1xf32> to vector<8x256xf32>
    %62 = arith.subf %58, %61 : vector<8x256xf32>
    %63 = math.exp %62 : vector<8x256xf32>
    %cst_40 = arith.constant dense<0.000000e+00> : vector<8xf32>
    %64 = vector.multi_reduction <add>, %63, %cst_40 [1] : vector<8x256xf32> to vector<8xf32>
    %65 = vector.shape_cast %64 : vector<8xf32> to vector<8x1xf32>
    %66 = math.log %65 : vector<8x1xf32>
    %67 = vector.broadcast %66 : vector<8x1xf32> to vector<8x256xf32>
    %68 = arith.subf %62, %67 : vector<8x256xf32>
    %c0_41 = arith.constant 0 : index
    %c0_42 = arith.constant 0 : index
    %c0_43 = arith.constant 0 : index
    %69 = vector.load %arg8[%c0_41, %c0_42, %c0_43] : memref<1x8x256xf32, #tpu.memory_space<vmem>>, vector<1x8x256xf32>
    %70 = vector.shape_cast %69 : vector<1x8x256xf32> to vector<8x256xf32>
    %71 = vector.shape_cast %68 : vector<8x256xf32> to vector<1x8x256xf32>
    tpu.vector_store %arg8[%c0_41, %c0_42, %c0_43], %71 {strides = array<i32>} : memref<1x8x256xf32, #tpu.memory_space<vmem>>, vector<1x8x256xf32>,
    %c0_44 = arith.constant 0 : index
    %c0_45 = arith.constant 0 : index
    %72 = vector.load %arg11[%c0_44, %c0_45] : memref<8x128xf32, #tpu.memory_space<vmem>>, vector<8x128xf32>
    tpu.vector_store %arg11[%c0_44, %c0_45], %52 {strides = array<i32>} : memref<8x128xf32, #tpu.memory_space<vmem>>, vector<8x128xf32>,
    %c0_46 = arith.constant 0 : index
    %c0_47 = arith.constant 0 : index
    %73 = vector.load %arg9[%c0_46, %c0_47] : memref<8x128xf32, #tpu.memory_space<vmem>>, vector<8x128xf32>
    tpu.vector_store %arg9[%c0_46, %c0_47], %52 {strides = array<i32>} : memref<8x128xf32, #tpu.memory_space<vmem>>, vector<8x128xf32>,
    return
  }
  func.func @transform_0(%arg0: i32, %arg1: memref<1x8xi32, #tpu.memory_space<smem>>) -> (i32, i32) {
    %c0_i32 = arith.constant 0 : i32
    %c0_i32_0 = arith.constant 0 : i32
    %c0_i32_1 = arith.constant 0 : i32
    return %c0_i32, %c0_i32_0 : i32, i32
  }
  func.func @transform_1(%arg0: i32, %arg1: memref<1x8xi32, #tpu.memory_space<smem>>) -> (i32, i32) {
    %c0_i32 = arith.constant 0 : i32
    %c0_i32_0 = arith.constant 0 : i32
    %c0_i32_1 = arith.constant 0 : i32
    return %c0_i32, %c0_i32_0 : i32, i32
  }
  func.func @transform_2(%arg0: i32, %arg1: memref<1x8xi32, #tpu.memory_space<smem>>) -> (i32, i32) {
    %c0_i32 = arith.constant 0 : i32
    %c0_i32_0 = arith.constant 0 : i32
    %c0_i32_1 = arith.constant 0 : i32
    return %c0_i32, %c0_i32_0 : i32, i32
  }
  func.func @transform_3(%arg0: i32, %arg1: memref<1x8xi32, #tpu.memory_space<smem>>) -> (i32, i32) {
    %c0_i32 = arith.constant 0 : i32
    %c0_i32_0 = arith.constant 0 : i32
    %c0_i32_1 = arith.constant 0 : i32
    return %c0_i32, %c0_i32_0 : i32, i32
  }
  func.func @transform_4(%arg0: i32, %arg1: memref<1x8xi32, #tpu.memory_space<smem>>) -> (i32, i32) {
    %c0_i32 = arith.constant 0 : i32
    %c0_i32_0 = arith.constant 0 : i32
    %c0_i32_1 = arith.constant 0 : i32
    return %c0_i32, %c0_i32_0 : i32, i32
  }
  func.func @transform_5(%arg0: i32, %arg1: memref<1x8xi32, #tpu.memory_space<smem>>) -> (i32, i32) {
    %c0_i32 = arith.constant 0 : i32
    %c0_i32_0 = arith.constant 0 : i32
    %c0_i32_1 = arith.constant 0 : i32
    return %c0_i32, %c0_i32_0 : i32, i32
  }
  func.func @transform_6(%arg0: i32, %arg1: memref<1x8xi32, #tpu.memory_space<smem>>) -> (i32, i32, i32) {
    %c0_i32 = arith.constant 0 : i32
    %c0_i32_0 = arith.constant 0 : i32
    %c0_i32_1 = arith.constant 0 : i32
    return %arg0, %c0_i32, %c0_i32_0 : i32, i32, i32
  }
  func.func @transform_7(%arg0: i32, %arg1: memref<1x8xi32, #tpu.memory_space<smem>>) -> (i32, i32) {
    %c0_i32 = arith.constant 0 : i32
    %c0_i32_0 = arith.constant 0 : i32
    %c0_i32_1 = arith.constant 0 : i32
    return %c0_i32, %c0_i32_0 : i32, i32
  }
}

</mosaic_0001>

<llo_original>
// kernel: decoder_forward.1
$region0: #{decoder_forward.1}
  #allocation0 [shape = 'u32[]', space=smem, size = 0x4, offset = 0x4, fixed_abs, tag = 'smem constant byte address 0x4 - core index']
  #allocation1 [shape = 'u32[144,128]{1,0:T(1,128)}', space=vmem, size = 0x12000, scoped, tag = 'internal scratch']
  #allocation2 [shape = 'f32[8,256]{1,0:T(8,128)}', space=vmem, size = 0x2000, scoped, tag = 'scratch operand']
  #allocation3 [shape = 'f32[8,128]{1,0:T(8,128)}', space=vmem, size = 0x1000, scoped, tag = 'scratch operand']
  #allocation4 [shape = 's32[1]{0}', space=sflag, size = 0x4, scoped, tag = 'scoped memory for decoder_forward.1']
  #allocation5 [shape = 'u8[512]{0}', space=smem, size = 0x200, scoped, tag = 'prefetched SMEM operand 0']
  %s0 = inlined_call_operand.vmem [shape: s32[1,8], index: 0, kind: input, shape index: {}]
  %s1 = inlined_call_operand.hbm [shape: f32[256,128], index: 1, kind: input, shape index: {}]
  %s2 = inlined_call_operand.vmem [shape: f32[8,128], index: 2, kind: input, shape index: {}]
  %s3 = inlined_call_operand.hbm [shape: bf16[256,128], index: 3, kind: input, shape index: {}]
  %s4 = inlined_call_operand.vmem [shape: f32[1,128], index: 4, kind: input, shape index: {}]
  %s5 = inlined_call_operand.hbm [shape: bf16[128,256], index: 5, kind: input, shape index: {}]
  %s6 = inlined_call_operand.vmem [shape: f32[1,256], index: 6, kind: input, shape index: {}]
  %s7 = inlined_call_operand.hbm [shape: f32[1,8,256], index: 7, kind: output, shape index: {0}]
  %s8 = inlined_call_operand.hbm [shape: f32[8,128], index: 8, kind: output, shape index: {1}]
  %9 = xla_tuple %s7, %s8
  %s10 = sld [smem:[#allocation0]]
  $region58: #{decoder_forward.1} parent=0
    _
  %s12 = ssub.s32 1, %s10
  %s13 = scalar_select 0, %s12, %s10
  %s14 = sshll.u32 %s0, 4
  %s15 = int_to_ptr.vmem [resolvable:$true] %s14
  %17 = dma.vmem_to_smem %s15, 16, [#allocation5], [#allocation4]
  %18 = dma.done [#allocation4], 16
  %19 = sfence
  $region1: #{decoder_forward.1} parent=0
    #allocation6 [shape = 'u8[131072]{0}', space=vmem, size = 0x20000, scoped, tag = 'input window, operand 1, single buffered']
    #allocation7 [shape = 's32[1]{0}', space=sflag, size = 0x4, scoped, tag = 'scoped memory for decoder_forward.1']
    #allocation8 [shape = 's32[1]{0}', space=sflag, size = 0x4, scoped, tag = 'scoped memory for decoder_forward.1']
    #allocation9 [shape = 'u8[65536]{0}', space=vmem, size = 0x10000, scoped, tag = 'input window, operand 3, single buffered']
    #allocation10 [shape = 's32[1]{0}', space=sflag, size = 0x4, scoped, tag = 'scoped memory for decoder_forward.1']
    #allocation11 [shape = 'u8[65536]{0}', space=vmem, size = 0x10000, scoped, tag = 'input window, operand 5, single buffered']
    #allocation12 [shape = 'u8[8192]{0}', space=vmem, size = 0x2000, scoped, tag = 'output window, operand 0, single buffered']
    #allocation13 [shape = 'u8[4096]{0}', space=vmem, size = 0x1000, scoped, tag = 'output window, operand 1, single buffered']
    #allocation14 [shape = 's32[1]{0}', space=sflag, size = 0x4, scoped, tag = 'scoped memory for decoder_forward.1']
    %20 = vsyncpa [#allocation7], 0
    %21 = vsyncpa [#allocation10], 0
    %22 = vsyncpa [#allocation8], 0
    %23 = vsyncpa [#allocation14], 0
    // Predicated region
    $region2: #{decoder_forward.1} parent=1 // pred_check
      _
    $region3: #{decoder_forward.1} parent=1 // pred_check_branch
      %25 = sbr.rel (0) target = $region5
    $region4: #{decoder_forward.1} parent=1 // pred_region
      %s27 = ssub.s32 4096, 4096
      %28 = vsyncadd [#allocation7], %s27
      %s29 = sshll.u32 [#allocation6], 4
      %s30 = int_to_ptr.vmem [resolvable:$true] %s29
      %35 = dma.hbm_to_vmem [thread:$0]  %s1, 4096, %s30, [#allocation7], 128, 128, 8
    $region5: #{decoder_forward.1} parent=1 // pred_fallthru
      _
    // Predicated region
    $region6: #{decoder_forward.1} parent=1 // pred_check
      _
    $region7: #{decoder_forward.1} parent=1 // pred_check_branch
      %37 = sbr.rel (0) target = $region9
    $region8: #{decoder_forward.1} parent=1 // pred_region
      _
    $region9: #{decoder_forward.1} parent=1 // pred_fallthru
      _
    // Predicated region
    $region10: #{decoder_forward.1} parent=1 // pred_check
      _
    $region11: #{decoder_forward.1} parent=1 // pred_check_branch
      %39 = sbr.rel (0) target = $region13
    $region12: #{decoder_forward.1} parent=1 // pred_region
      %s41 = ssub.s32 2048, 2048
      %42 = vsyncadd [#allocation10], %s41
      %s43 = sshll.u32 [#allocation9], 4
      %s44 = int_to_ptr.vmem [resolvable:$true] %s43
      %49 = dma.hbm_to_vmem [thread:$0]  %s3, 2048, %s44, [#allocation10], 64, 64, 4
    $region13: #{decoder_forward.1} parent=1 // pred_fallthru
      _
    // Predicated region
    $region14: #{decoder_forward.1} parent=1 // pred_check
      _
    $region15: #{decoder_forward.1} parent=1 // pred_check_branch
      %51 = sbr.rel (0) target = $region17
    $region16: #{decoder_forward.1} parent=1 // pred_region
      _
    $region17: #{decoder_forward.1} parent=1 // pred_fallthru
      _
    // Predicated region
    $region18: #{decoder_forward.1} parent=1 // pred_check
      _
    $region19: #{decoder_forward.1} parent=1 // pred_check_branch
      %53 = sbr.rel (0) target = $region21
    $region20: #{decoder_forward.1} parent=1 // pred_region
      %s55 = ssub.s32 2048, 2048
      %56 = vsyncadd [#allocation10], %s55
      %s57 = sshll.u32 [#allocation11], 4
      %s58 = int_to_ptr.vmem [resolvable:$true] %s57
      %63 = dma.hbm_to_vmem [thread:$0]  %s5, 2048, %s58, [#allocation10], 128, 128, 8
    $region21: #{decoder_forward.1} parent=1 // pred_fallthru
      _
    // Predicated region
    $region22: #{decoder_forward.1} parent=1 // pred_check
      _
    $region23: #{decoder_forward.1} parent=1 // pred_check_branch
      %65 = sbr.rel (0) target = $region25
    $region24: #{decoder_forward.1} parent=1 // pred_region
      _
    $region25: #{decoder_forward.1} parent=1 // pred_fallthru
      _
    // Predicated region
    $region26: #{decoder_forward.1} parent=1 // pred_check
      _
    $region27: #{decoder_forward.1} parent=1 // pred_check_branch
      %67 = sbr.rel (0) target = $region29
    $region28: #{decoder_forward.1} parent=1 // pred_region
      %68 = dma.done [#allocation7], 4096
    $region29: #{decoder_forward.1} parent=1 // pred_fallthru
      _
    // Predicated region
    $region30: #{decoder_forward.1} parent=1 // pred_check
      _
    $region31: #{decoder_forward.1} parent=1 // pred_check_branch
      %70 = sbr.rel (0) target = $region33
    $region32: #{decoder_forward.1} parent=1 // pred_region
      %71 = dma.done [#allocation10], 2048
    $region33: #{decoder_forward.1} parent=1 // pred_fallthru
      _
    // Predicated region
    $region34: #{decoder_forward.1} parent=1 // pred_check
      _
    $region35: #{decoder_forward.1} parent=1 // pred_check_branch
      %73 = sbr.rel (0) target = $region37
    $region36: #{decoder_forward.1} parent=1 // pred_region
      %74 = dma.done [#allocation10], 2048
    $region37: #{decoder_forward.1} parent=1 // pred_fallthru
      _
    %p76 = scmp.eq.s32.totalorder 0, 0
    // Predicated region
    $region38: #{decoder_forward.1} parent=1 // pred_check
      %p77 = pneg %p76
    $region39: #{decoder_forward.1} parent=1 // pred_check_branch
      %79 = sbr.rel (%p77) target = $region41
    $region40: #{decoder_forward.1} parent=1 // pred_region
      %v80 = vld [vmem:[%s2] sm:$0xff]
      %81 = vst [vmem:[#allocation3] sm:$0xff] %v80
    $region41: #{decoder_forward.1} parent=1 // pred_fallthru
      _
    %s82 = smul.u32 0, 128
    %s83 = sld [smem:[#allocation5 + %s82]]
    %s84 = scalar_lea.vmem [#allocation6], %s83
    %v85 = vld [vmem:[%s84] sm:$0x1]
    %86 = vst [vmem:[#allocation2] sm:$0x1] %v85
    %s87 = sadd.s32 %s82, 1
    %s88 = sld [smem:[#allocation5 + %s87]]
    %s89 = scalar_lea.vmem [#allocation6], %s88
    %v90 = vld [vmem:[%s89] sm:$0x1]
    %91 = vst [vmem:[#allocation2 + $0x1] sm:$0x1] %v90
    %s92 = sadd.s32 %s82, 2
    %s93 = sld [smem:[#allocation5 + %s92]]
    %s94 = scalar_lea.vmem [#allocation6], %s93
    %v95 = vld [vmem:[%s94] sm:$0x1]
    %96 = vst [vmem:[#allocation2 + $0x2] sm:$0x1] %v95
    %s97 = sadd.s32 %s82, 3
    %s98 = sld [smem:[#allocation5 + %s97]]
    %s99 = scalar_lea.vmem [#allocation6], %s98
    %v100 = vld [vmem:[%s99] sm:$0x1]
    %101 = vst [vmem:[#allocation2 + $0x3] sm:$0x1] %v100
    %s102 = sadd.s32 %s82, 4
    %s103 = sld [smem:[#allocation5 + %s102]]
    %s104 = scalar_lea.vmem [#allocation6], %s103
    %v105 = vld [vmem:[%s104] sm:$0x1]
    %106 = vst [vmem:[#allocation2 + $0x4] sm:$0x1] %v105
    %s107 = sadd.s32 %s82, 5
    %s108 = sld [smem:[#allocation5 + %s107]]
    %s109 = scalar_lea.vmem [#allocation6], %s108
    %v110 = vld [vmem:[%s109] sm:$0x1]
    %111 = vst [vmem:[#allocation2 + $0x5] sm:$0x1] %v110
    %s112 = sadd.s32 %s82, 6
    %s113 = sld [smem:[#allocation5 + %s112]]
    %s114 = scalar_lea.vmem [#allocation6], %s113
    %v115 = vld [vmem:[%s114] sm:$0x1]
    %116 = vst [vmem:[#allocation2 + $0x6] sm:$0x1] %v115
    %s117 = sadd.s32 %s82, 7
    %s118 = sld [smem:[#allocation5 + %s117]]
    %s119 = scalar_lea.vmem [#allocation6], %s118
    %v120 = vld [vmem:[%s119] sm:$0x1]
    %121 = vst [vmem:[#allocation2 + $0x7] sm:$0x1] %v120
    %v122 = vld [vmem:[#allocation3] sm:$0xff]
    %123 = vst [vmem:[#allocation2 + $0x8] sm:$0xff] %v122
    %v124 = vld [vmem:[#allocation2] sm:$0xff]
    %v125 = vld [vmem:[#allocation2 + $0x8] sm:$0xff]
    %v126 = vpack.c.bf16 %v124, %v124
    %v127 = vpack.c.bf16 %v125, %v125
    %v128 = vld [vmem:[#allocation9] sm:$0xf]
    %v129 = vld [vmem:[#allocation9 + $0x4] sm:$0xf]
    %v130 = vld [vmem:[#allocation9 + $0x8] sm:$0xf]
    %v131 = vld [vmem:[#allocation9 + $0xc] sm:$0xf]
    %v132 = vld [vmem:[#allocation9 + $0x10] sm:$0xf]
    %v133 = vld [vmem:[#allocation9 + $0x14] sm:$0xf]
    %v134 = vld [vmem:[#allocation9 + $0x18] sm:$0xf]
    %v135 = vld [vmem:[#allocation9 + $0x1c] sm:$0xf]
    %v136 = vld [vmem:[#allocation9 + $0x20] sm:$0xf]
    %v137 = vld [vmem:[#allocation9 + $0x24] sm:$0xf]
    %v138 = vld [vmem:[#allocation9 + $0x28] sm:$0xf]
    %v139 = vld [vmem:[#allocation9 + $0x2c] sm:$0xf]
    %v140 = vld [vmem:[#allocation9 + $0x30] sm:$0xf]
    %v141 = vld [vmem:[#allocation9 + $0x34] sm:$0xf]
    %v142 = vld [vmem:[#allocation9 + $0x38] sm:$0xf]
    %v143 = vld [vmem:[#allocation9 + $0x3c] sm:$0xf]
    %v144 = vld [vmem:[#allocation9 + $0x40] sm:$0xf]
    %v145 = vld [vmem:[#allocation9 + $0x44] sm:$0xf]
    %v146 = vld [vmem:[#allocation9 + $0x48] sm:$0xf]
    %v147 = vld [vmem:[#allocation9 + $0x4c] sm:$0xf]
    %v148 = vld [vmem:[#allocation9 + $0x50] sm:$0xf]
    %v149 = vld [vmem:[#allocation9 + $0x54] sm:$0xf]
    %v150 = vld [vmem:[#allocation9 + $0x58] sm:$0xf]
    %v151 = vld [vmem:[#allocation9 + $0x5c] sm:$0xf]
    %v152 = vld [vmem:[#allocation9 + $0x60] sm:$0xf]
    %v153 = vld [vmem:[#allocation9 + $0x64] sm:$0xf]
    %v154 = vld [vmem:[#allocation9 + $0x68] sm:$0xf]
    %v155 = vld [vmem:[#allocation9 + $0x6c] sm:$0xf]
    %v156 = vld [vmem:[#allocation9 + $0x70] sm:$0xf]
    %v157 = vld [vmem:[#allocation9 + $0x74] sm:$0xf]
    %v158 = vld [vmem:[#allocation9 + $0x78] sm:$0xf]
    %v159 = vld [vmem:[#allocation9 + $0x7c] sm:$0xf]
    %v160 = vld [vmem:[%s4] sm:$0x1]
    %v162 = vlaneseq
    %v163 = vshrl.u32 %v162, 7
    %v164 = vsub.s32 0, %v163
    %v165 = vrot.slane %v160, %v164
    %v199 = vunpack.c.l.b16 %v128
    %v200 = vunpack.c.l.b16 %v129
    %v201 = vunpack.c.l.b16 %v130
    %v202 = vunpack.c.l.b16 %v131
    %v203 = vunpack.c.l.b16 %v132
    %v204 = vunpack.c.l.b16 %v133
    %v205 = vunpack.c.l.b16 %v134
    %v206 = vunpack.c.l.b16 %v135
    %v207 = vunpack.c.l.b16 %v136
    %v208 = vunpack.c.l.b16 %v137
    %v209 = vunpack.c.l.b16 %v138
    %v210 = vunpack.c.l.b16 %v139
    %v211 = vunpack.c.l.b16 %v140
    %v212 = vunpack.c.l.b16 %v141
    %v213 = vunpack.c.l.b16 %v142
    %v214 = vunpack.c.l.b16 %v143
    %v215 = vunpack.c.l.b16 %v144
    %v216 = vunpack.c.l.b16 %v145
    %v217 = vunpack.c.l.b16 %v146
    %v218 = vunpack.c.l.b16 %v147
    %v219 = vunpack.c.l.b16 %v148
    %v220 = vunpack.c.l.b16 %v149
    %v221 = vunpack.c.l.b16 %v150
    %v222 = vunpack.c.l.b16 %v151
    %v223 = vunpack.c.l.b16 %v152
    %v224 = vunpack.c.l.b16 %v153
    %v225 = vunpack.c.l.b16 %v154
    %v226 = vunpack.c.l.b16 %v155
    %v227 = vunpack.c.l.b16 %v156
    %v228 = vunpack.c.l.b16 %v157
    %v229 = vunpack.c.l.b16 %v158
    %v230 = vunpack.c.l.b16 %v159
    %v231 = vpack.c.b16 %v200, %v199
    %v232 = vpack.c.b16 %v202, %v201
    %v233 = vpack.c.b16 %v204, %v203
    %v234 = vpack.c.b16 %v206, %v205
    %v235 = vpack.c.b16 %v208, %v207
    %v236 = vpack.c.b16 %v210, %v209
    %v237 = vpack.c.b16 %v212, %v211
    %v238 = vpack.c.b16 %v214, %v213
    %v239 = vpack.c.b16 %v216, %v215
    %v240 = vpack.c.b16 %v218, %v217
    %v241 = vpack.c.b16 %v220, %v219
    %v242 = vpack.c.b16 %v222, %v221
    %v243 = vpack.c.b16 %v224, %v223
    %v244 = vpack.c.b16 %v226, %v225
    %v245 = vpack.c.b16 %v228, %v227
    %v246 = vpack.c.b16 %v230, %v229
    %263 = vmatprep.subr.bf16.mxu0 0
    %264 = vmatpush1.bf16.msra.mxu0 %v231
    %265 = vmatprep.subr.bf16.mxu0 0
    %266 = vmatpush1.bf16.msra.mxu0 %v232
    %267 = vmatprep.subr.bf16.mxu0 0
    %268 = vmatpush1.bf16.msra.mxu0 %v233
    %269 = vmatprep.subr.bf16.mxu0 0
    %270 = vmatpush1.bf16.msra.mxu0 %v234
    %271 = vmatprep.subr.bf16.mxu0 0
    %272 = vmatpush1.bf16.msra.mxu0 %v235
    %273 = vmatprep.subr.bf16.mxu0 0
    %274 = vmatpush1.bf16.msra.mxu0 %v236
    %275 = vmatprep.subr.bf16.mxu0 0
    %276 = vmatpush1.bf16.msra.mxu0 %v237
    %277 = vmatprep.subr.bf16.mxu0 0
    %278 = vmatpush1.bf16.msra.mxu0 %v238
    %279 = vmatprep.subr.bf16.mxu0 0
    %280 = vmatpush1.bf16.msra.mxu0 %v239
    %281 = vmatprep.subr.bf16.mxu0 0
    %282 = vmatpush1.bf16.msra.mxu0 %v240
    %283 = vmatprep.subr.bf16.mxu0 0
    %284 = vmatpush1.bf16.msra.mxu0 %v241
    %285 = vmatprep.subr.bf16.mxu0 0
    %286 = vmatpush1.bf16.msra.mxu0 %v242
    %287 = vmatprep.subr.bf16.mxu0 0
    %288 = vmatpush1.bf16.msra.mxu0 %v243
    %289 = vmatprep.subr.bf16.mxu0 0
    %290 = vmatpush1.bf16.msra.mxu0 %v244
    %291 = vmatprep.subr.bf16.mxu0 0
    %292 = vmatpush1.bf16.msra.mxu0 %v245
    %293 = vmatprep.subr.bf16.mxu0 0
    %294 = vmatpush1.bf16.msra.mxu0 %v246
    %295 = vmatprep.mubr.bf16.mxu0 %v127
    %296 = vmatmul.mubr.bf16.gmra.mrb[0].mxu0 %v126
    %v297 = vpop.f32.mrb[0].mxu0
    %v298 = vadd.f32 %v165, %v297
    %v299 = vpop.f32.mrb[0].mxu0
    %v300 = vpop.f32.mrb[0].mxu0
    %v301 = vpop.f32.mrb[0].mxu0
    %302 = vdwg.mxu0
    %v303 = vtanh.pop %v298
    %v304 = vpack.c.bf16 %v303, %v303
    %v305 = vld [vmem:[#allocation11] sm:$0xff]
    %v306 = vld [vmem:[#allocation11 + $0x8] sm:$0xff]
    %v307 = vld [vmem:[#allocation11 + $0x10] sm:$0xff]
    %v308 = vld [vmem:[#allocation11 + $0x18] sm:$0xff]
    %v309 = vld [vmem:[#allocation11 + $0x20] sm:$0xff]
    %v310 = vld [vmem:[#allocation11 + $0x28] sm:$0xff]
    %v311 = vld [vmem:[#allocation11 + $0x30] sm:$0xff]
    %v312 = vld [vmem:[#allocation11 + $0x38] sm:$0xff]
    %v313 = vld [vmem:[#allocation11 + $0x40] sm:$0xff]
    %v314 = vld [vmem:[#allocation11 + $0x48] sm:$0xff]
    %v315 = vld [vmem:[#allocation11 + $0x50] sm:$0xff]
    %v316 = vld [vmem:[#allocation11 + $0x58] sm:$0xff]
    %v317 = vld [vmem:[#allocation11 + $0x60] sm:$0xff]
    %v318 = vld [vmem:[#allocation11 + $0x68] sm:$0xff]
    %v319 = vld [vmem:[#allocation11 + $0x70] sm:$0xff]
    %v320 = vld [vmem:[#allocation11 + $0x78] sm:$0xff]
    %v321 = vld [vmem:[%s6] sm:$0x3]
    %v323 = vlaneseq
    %v324 = vshrl.u32 %v323, 7
    %v325 = vsub.s32 0, %v324
    %v326 = vrot.slane %v321, %v325
    %v327 = vlaneseq
    %v328 = vshrl.u32 %v327, 7
    %v329 = vsub.s32 1, %v328
    %v330 = vrot.slane %v321, %v329
    %v349 = vunpack.c.l.b16 %v305
    %v350 = vunpack.c.h.b16 %v305
    %v351 = vunpack.c.l.b16 %v306
    %v352 = vunpack.c.h.b16 %v306
    %v353 = vunpack.c.l.b16 %v307
    %v354 = vunpack.c.h.b16 %v307
    %v355 = vunpack.c.l.b16 %v308
    %v356 = vunpack.c.h.b16 %v308
    %v357 = vunpack.c.l.b16 %v309
    %v358 = vunpack.c.h.b16 %v309
    %v359 = vunpack.c.l.b16 %v310
    %v360 = vunpack.c.h.b16 %v310
    %v361 = vunpack.c.l.b16 %v311
    %v362 = vunpack.c.h.b16 %v311
    %v363 = vunpack.c.l.b16 %v312
    %v364 = vunpack.c.h.b16 %v312
    %v365 = vunpack.c.l.b16 %v313
    %v366 = vunpack.c.h.b16 %v313
    %v367 = vunpack.c.l.b16 %v314
    %v368 = vunpack.c.h.b16 %v314
    %v369 = vunpack.c.l.b16 %v315
    %v370 = vunpack.c.h.b16 %v315
    %v371 = vunpack.c.l.b16 %v316
    %v372 = vunpack.c.h.b16 %v316
    %v373 = vunpack.c.l.b16 %v317
    %v374 = vunpack.c.h.b16 %v317
    %v375 = vunpack.c.l.b16 %v318
    %v376 = vunpack.c.h.b16 %v318
    %v377 = vunpack.c.l.b16 %v319
    %v378 = vunpack.c.h.b16 %v319
    %v379 = vunpack.c.l.b16 %v320
    %v380 = vunpack.c.h.b16 %v320
    %v381 = vpack.c.b16 %v351, %v349
    %v382 = vpack.c.b16 %v352, %v350
    %v383 = vpack.c.b16 %v355, %v353
    %v384 = vpack.c.b16 %v356, %v354
    %v385 = vpack.c.b16 %v359, %v357
    %v386 = vpack.c.b16 %v360, %v358
    %v387 = vpack.c.b16 %v363, %v361
    %v388 = vpack.c.b16 %v364, %v362
    %v389 = vpack.c.b16 %v367, %v365
    %v390 = vpack.c.b16 %v368, %v366
    %v391 = vpack.c.b16 %v371, %v369
    %v392 = vpack.c.b16 %v372, %v370
    %v393 = vpack.c.b16 %v375, %v373
    %v394 = vpack.c.b16 %v376, %v374
    %v395 = vpack.c.b16 %v379, %v377
    %v396 = vpack.c.b16 %v380, %v378
    %413 = vmatprep.subr.bf16.mxu0 %v382
    %414 = vmatpush1.bf16.msra.mxu0 %v381
    %415 = vmatprep.subr.bf16.mxu0 %v384
    %416 = vmatpush1.bf16.msra.mxu0 %v383
    %417 = vmatprep.subr.bf16.mxu0 %v386
    %418 = vmatpush1.bf16.msra.mxu0 %v385
    %419 = vmatprep.subr.bf16.mxu0 %v388
    %420 = vmatpush1.bf16.msra.mxu0 %v387
    %421 = vmatprep.subr.bf16.mxu0 %v390
    %422 = vmatpush1.bf16.msra.mxu0 %v389
    %423 = vmatprep.subr.bf16.mxu0 %v392
    %424 = vmatpush1.bf16.msra.mxu0 %v391
    %425 = vmatprep.subr.bf16.mxu0 %v394
    %426 = vmatpush1.bf16.msra.mxu0 %v393
    %427 = vmatprep.subr.bf16.mxu0 %v396
    %428 = vmatpush1.bf16.msra.mxu0 %v395
    %429 = vmatprep.subr.bf16.mxu0 0
    %430 = vmatpush1.bf16.msra.mxu0 0
    %431 = vmatprep.subr.bf16.mxu0 0
    %432 = vmatpush1.bf16.msra.mxu0 0
    %433 = vmatprep.subr.bf16.mxu0 0
    %434 = vmatpush1.bf16.msra.mxu0 0
    %435 = vmatprep.subr.bf16.mxu0 0
    %436 = vmatpush1.bf16.msra.mxu0 0
    %437 = vmatprep.subr.bf16.mxu0 0
    %438 = vmatpush1.bf16.msra.mxu0 0
    %439 = vmatprep.subr.bf16.mxu0 0
    %440 = vmatpush1.bf16.msra.mxu0 0
    %441 = vmatprep.subr.bf16.mxu0 0
    %442 = vmatpush1.bf16.msra.mxu0 0
    %443 = vmatprep.subr.bf16.mxu0 0
    %444 = vmatpush1.bf16.msra.mxu0 0
    %445 = vmatprep.mubr.bf16.mxu0 0
    %446 = vmatmul.mubr.bf16.gmra.mrb[0].mxu0 %v304
    %v447 = vpop.f32.mrb[0].mxu0
    %v448 = vadd.f32 %v326, %v447
    %v449 = vpop.f32.mrb[0].mxu0
    %v450 = vadd.f32 %v330, %v449
    %v451 = vpop.f32.mrb[0].mxu0
    %v452 = vpop.f32.mrb[0].mxu0
    %453 = vdwg.mxu0
    %v454 = vmax.f32 %v448, %v450
    %455 = vmax.xlane.f32.xlu0 %v454
    %v456 = vpop.xlane.xlu0 %455
    %v457 = vsub.f32 %v448, %v456
    %v458 = vsub.f32 %v450, %v456
    %v459 = vmul.f32 %v457, 1.442695
    %v460 = vpow.pop %v459
    %v461 = vmul.f32 %v458, 1.442695
    %v462 = vpow.pop %v461
    %v463 = vadd.f32 %v460, %v462
    %464 = vadd.xlane.f32.xlu0 %v463
    %v465 = vpop.xlane.xlu0 %464
    %v466 = vlog2.pop %v465
    %v467 = vmul.f32 %v466, 0.6931472
    %v468 = vsub.f32 %v457, %v467
    %v469 = vsub.f32 %v458, %v467
    %470 = vst [vmem:[#allocation12] sm:$0xff] %v468
    %471 = vst [vmem:[#allocation12 + $0x8] sm:$0xff] %v469
    %472 = vst [vmem:[#allocation3] sm:$0xff] %v303
    %473 = vst [vmem:[#allocation13] sm:$0xff] %v303
    // Predicated region
    $region42: #{decoder_forward.1} parent=1 // pred_check
      _
    $region43: #{decoder_forward.1} parent=1 // pred_check_branch
      %475 = sbr.rel (0) target = $region45
    $region44: #{decoder_forward.1} parent=1 // pred_region
      %s477 = ssub.s32 256, 256
      %478 = vsyncadd [#allocation8], %s477
      %s480 = sshll.u32 [#allocation12], 4
      %s481 = int_to_ptr.vmem [resolvable:$true] %s480
      %483 = dma.vmem_to_hbm [thread:$0]  %s481, 256, %s7, [#allocation8]
    $region45: #{decoder_forward.1} parent=1 // pred_fallthru
      _
    // Predicated region
    $region46: #{decoder_forward.1} parent=1 // pred_check
      _
    $region47: #{decoder_forward.1} parent=1 // pred_check_branch
      %485 = sbr.rel (0) target = $region49
    $region48: #{decoder_forward.1} parent=1 // pred_region
      %s487 = ssub.s32 128, 128
      %488 = vsyncadd [#allocation14], %s487
      %s490 = sshll.u32 [#allocation13], 4
      %s491 = int_to_ptr.vmem [resolvable:$true] %s490
      %493 = dma.vmem_to_hbm [thread:$0]  %s491, 128, %s8, [#allocation14]
    $region49: #{decoder_forward.1} parent=1 // pred_fallthru
      _
    // Predicated region
    $region50: #{decoder_forward.1} parent=1 // pred_check
      _
    $region51: #{decoder_forward.1} parent=1 // pred_check_branch
      %495 = sbr.rel (0) target = $region53
    $region52: #{decoder_forward.1} parent=1 // pred_region
      %496 = dma.done [#allocation8], 256
    $region53: #{decoder_forward.1} parent=1 // pred_fallthru
      _
    // Predicated region
    $region54: #{decoder_forward.1} parent=1 // pred_check
      _
    $region55: #{decoder_forward.1} parent=1 // pred_check_branch
      %498 = sbr.rel (0) target = $region57
    $region56: #{decoder_forward.1} parent=1 // pred_region
      %499 = dma.done [#allocation14], 128
    $region57: #{decoder_forward.1} parent=1 // pred_fallthru
      _
    %500 = vsyncpa [#allocation7], 1
    %501 = vsyncpa [#allocation10], 1
    %502 = vsyncpa [#allocation8], 1
    %503 = vsyncpa [#allocation14], 1

</llo_original>
